<compile_context>
chip_gen: v7x
topology: tpu7x:2x2x1
jax: 0.10.0
libtpu: 0.0.40
codegen_flags: <defaults>
</compile_context>

<pallas_src>
import functools

import jax
import jax.numpy as jnp
import numpy as np
from jax.experimental import pallas as pl
from jax.experimental.pallas import tpu as pltpu

# ----------------------------- configuration --------------------------------
B = 2            # batch
T = 8            # sequence length (== block_size for the causal tril)
N_EMBED = 32     # embedding dim (C)
NUM_HEADS = 4
HEAD_SIZE = 8    # NUM_HEADS * HEAD_SIZE == N_EMBED (as in GPT blocks)
DROPOUT = 0.1    # unused in eval mode

HD = NUM_HEADS * HEAD_SIZE   # packed head dim
NEG_BIG = -1e30              # finite "masked" additive bias (no -inf NaN hazard)


# ------------------------------- kernel -------------------------------------
def _mha_kernel(x_ref, bias_ref, wqkv_ref, wpt_ref, bp_ref, o_ref,
                *, num_heads, head_size):
    """One grid step == one batch element.

    x_ref    : (1, T, C)      VMEM  (this batch element)
    bias_ref : (T, T)         VMEM  additive causal bias (0 / -1e30), resident
    wqkv_ref : (C, 3*H*hs)    VMEM  (Wq | Wk | Wv packed along columns), resident
    wpt_ref  : (H*hs, C)      VMEM  (projection weight, transposed), resident
    bp_ref   : (1, C)         VMEM  (projection bias), resident
    o_ref    : (1, T, C)      VMEM
    """
    seq = x_ref.shape[1]
    n_embed = x_ref.shape[2]
    hd = num_heads * head_size

    # bf16 MXU operands, f32 accumulation.
    x = x_ref[0].astype(jnp.bfloat16)                     # (T, C)
    wqkv = wqkv_ref[...].astype(jnp.bfloat16)             # (C, 3*HD)
    wpt = wpt_ref[...].astype(jnp.bfloat16)               # (HD, C)
    bias = bias_ref[...]                                  # (T, T) f32

    # One fused QKV matmul for all heads (MXU, bf16 in / f32 acc).
    qkv = jnp.dot(x, wqkv, preferred_element_type=jnp.float32)   # (T, 3*HD)
    qkv_bf = qkv.astype(jnp.bfloat16)

    scale = head_size ** -0.5
    y = jnp.zeros((seq, n_embed), dtype=jnp.float32)

    # Per-head: static lane slices feed the dots directly; the head merge is
    # folded into the output projection (sum over per-head contributions), so
    # no (H, T, hs) stack / lane concat is ever materialized.
    for h in range(num_heads):
        lo = h * head_size
        q_h = qkv_bf[:, 0 * hd + lo: 0 * hd + lo + head_size]    # (T, hs)
        k_h = qkv_bf[:, 1 * hd + lo: 1 * hd + lo + head_size]
        v_h = qkv_bf[:, 2 * hd + lo: 2 * hd + lo + head_size]

        # scores: q @ k^T (contract last dims; no explicit transpose), f32 acc.
        s = jax.lax.dot_general(
            q_h, k_h, (((1,), (1,)), ((), ())),
            preferred_element_type=jnp.float32) * scale          # (T, T)
        s = s + bias                                             # causal mask

        # softmax kept in f32 (v5e VPU/EUP have no bf16); rcp on the EUP.
        s = s - jnp.max(s, axis=-1, keepdims=True)
        p = jnp.exp(s)
        p = p * pl.reciprocal(jnp.sum(p, axis=-1, keepdims=True), approx=True)
        # (attention dropout is identity in eval mode)

        o_h = jnp.dot(p.astype(jnp.bfloat16), v_h,
                      preferred_element_type=jnp.float32)        # (T, hs)

        # Head merge folded into the projection: y += o_h @ Wp^T[h-block].
        y = y + jnp.dot(o_h.astype(jnp.bfloat16),
                        wpt[lo:lo + head_size, :],
                        preferred_element_type=jnp.float32)      # (T, C)

    y = y + bp_ref[...]
    # (output dropout is identity in eval mode)
    # TODO(synk): output last dim C=32 < 128 lowers to masked vst; at real
    #             sizes arrange a lane-dense (>=128) output slab.
    o_ref[0] = y.astype(o_ref.dtype)


# ------------------------------- wrapper -------------------------------------
@jax.jit
def multi_head_attention(x, wqkv, wpt, bp):
    Bx, Tx, Cx = x.shape

    # Additive causal bias, built once at trace time (hoisted out of the kernel).
    tril = jnp.tril(jnp.ones((Tx, Tx), dtype=bool))
    causal_bias = jnp.where(tril, 0.0, NEG_BIG).astype(jnp.float32)

    kernel = functools.partial(_mha_kernel,
                               num_heads=NUM_HEADS, head_size=HEAD_SIZE)

    return pl.pallas_call(
        kernel,
        out_shape=jax.ShapeDtypeStruct((Bx, Tx, Cx), jnp.float32),
        grid=(Bx,),
        in_specs=[
            pl.BlockSpec((1, Tx, Cx), lambda b: (b, 0, 0)),       # x[b]
            pl.BlockSpec(causal_bias.shape, lambda b: (0, 0)),    # mask (resident)
            pl.BlockSpec(wqkv.shape, lambda b: (0, 0)),           # Wqkv (resident)
            pl.BlockSpec(wpt.shape, lambda b: (0, 0)),            # Wproj^T (resident)
            pl.BlockSpec(bp.shape, lambda b: (0, 0)),             # bias (resident)
        ],
        out_specs=pl.BlockSpec((1, Tx, Cx), lambda b: (b, 0, 0)),
        compiler_params=pltpu.CompilerParams(
            dimension_semantics=("parallel",)),                   # v7x: 2 TCs
    )(x, causal_bias, wqkv, wpt, bp)


# ---------------------------- pure-JAX reference -----------------------------
def reference(x, wq, wk, wv, wpt, bp):
    q = x @ wq            # (B, T, H*hs)
    k = x @ wk
    v = x @ wv
    outs = []
    tril = jnp.tril(jnp.ones((T, T), dtype=bool))
    for h in range(NUM_HEADS):
        lo, hi = h * HEAD_SIZE, (h + 1) * HEAD_SIZE
        qh, kh, vh = q[..., lo:hi], k[..., lo:hi], v[..., lo:hi]
        s = jnp.einsum("btd,bsd->bts", qh, kh) * (HEAD_SIZE ** -0.5)
        s = jnp.where(tril[None], s, -jnp.inf)
        p = jax.nn.softmax(s, axis=-1)
        outs.append(jnp.einsum("bts,bsd->btd", p, vh))
    cat = jnp.concatenate(outs, axis=-1)
    return cat @ wpt + bp


# --------------------------------- main --------------------------------------
if __name__ == "__main__":
    key = jax.random.PRNGKey(0)
    kx, k1, k2, k3, k4, k5 = jax.random.split(key, 6)

    x = jax.random.normal(kx, (B, T, N_EMBED), dtype=jnp.float32)
    # Per-head key/query/value weights, packed: column block h is W_h^T (C, hs).
    wq = 0.1 * jax.random.normal(k1, (N_EMBED, HD), dtype=jnp.float32)
    wk = 0.1 * jax.random.normal(k2, (N_EMBED, HD), dtype=jnp.float32)
    wv = 0.1 * jax.random.normal(k3, (N_EMBED, HD), dtype=jnp.float32)
    # Projection Linear(hd -> n_embed): pass weight transposed, plus bias.
    wpt = 0.1 * jax.random.normal(k4, (HD, N_EMBED), dtype=jnp.float32)
    bp = 0.1 * jax.random.normal(k5, (1, N_EMBED), dtype=jnp.float32)

    # Fused QKV weight: (C, 3*H*hs) = [Wq | Wk | Wv].
    wqkv = jnp.concatenate([wq, wk, wv], axis=1)

    out = multi_head_attention(x, wqkv, wpt, bp)
    out = jax.block_until_ready(out)

    ref = reference(x, wq, wk, wv, wpt, bp)
    np.testing.assert_allclose(np.asarray(out), np.asarray(ref),
                               rtol=2e-2, atol=2e-2)
    print("KERNEL_OK")
</pallas_src>

<mosaic_0001>
module attributes {stable_mosaic.version = 11 : i64} {
  func.func @_mha_kernel(%arg0: i32, %arg1: memref<1x8x32xf32, #tpu.memory_space<vmem>>, %arg2: memref<8x8xf32, #tpu.memory_space<vmem>>, %arg3: memref<32x96xf32, #tpu.memory_space<vmem>>, %arg4: memref<32x32xf32, #tpu.memory_space<vmem>>, %arg5: memref<1x32xf32, #tpu.memory_space<vmem>>, %arg6: memref<1x8x32xf32, #tpu.memory_space<vmem>>) attributes {dimension_semantics = [#tpu.dimension_semantics<parallel>], iteration_bounds = array<i64: 2>, scalar_prefetch = 0 : i64, scratch_operands = 0 : i64, tpu.core_type = #tpu.core_type<tc>, window_params = [{transform_indices = @transform_0, window_bounds = array<i64: 1, 8, 32>}, {pipeline_mode = #tpu.pipeline_mode<synchronous>, transform_indices = @transform_1, window_bounds = array<i64: 8, 8>}, {pipeline_mode = #tpu.pipeline_mode<synchronous>, transform_indices = @transform_2, window_bounds = array<i64: 32, 96>}, {pipeline_mode = #tpu.pipeline_mode<synchronous>, transform_indices = @transform_3, window_bounds = array<i64: 32, 32>}, {pipeline_mode = #tpu.pipeline_mode<synchronous>, transform_indices = @transform_4, window_bounds = array<i64: 1, 32>}, {transform_indices = @transform_5, window_bounds = array<i64: 1, 8, 32>}]} {
    %c0 = arith.constant 0 : index
    %c0_0 = arith.constant 0 : index
    %c0_1 = arith.constant 0 : index
    %0 = vector.load %arg1[%c0, %c0_0, %c0_1] : memref<1x8x32xf32, #tpu.memory_space<vmem>>, vector<1x8x32xf32>
    %1 = vector.shape_cast %0 : vector<1x8x32xf32> to vector<8x32xf32>
    %2 = arith.truncf %1 : vector<8x32xf32> to vector<8x32xbf16>
    %c0_2 = arith.constant 0 : index
    %c0_3 = arith.constant 0 : index
    %3 = vector.load %arg3[%c0_2, %c0_3] : memref<32x96xf32, #tpu.memory_space<vmem>>, vector<32x96xf32>
    %4 = arith.truncf %3 : vector<32x96xf32> to vector<32x96xbf16>
    %c0_4 = arith.constant 0 : index
    %c0_5 = arith.constant 0 : index
    %5 = vector.load %arg4[%c0_4, %c0_5] : memref<32x32xf32, #tpu.memory_space<vmem>>, vector<32x32xf32>
    %6 = arith.truncf %5 : vector<32x32xf32> to vector<32x32xbf16>
    %c0_6 = arith.constant 0 : index
    %c0_7 = arith.constant 0 : index
    %7 = vector.load %arg2[%c0_6, %c0_7] : memref<8x8xf32, #tpu.memory_space<vmem>>, vector<8x8xf32>
    %cst = arith.constant dense<0.000000e+00> : vector<8x96xf32>
    %8 = tpu.matmul %2, %4, %cst {dimension_numbers = #tpu.dot_dimension_numbers<[1], [0], [0], [1], [0, 0, 1, 1], [], []>} : vector<8x32xbf16>, vector<32x96xbf16>, vector<8x96xf32> -> vector<8x96xf32>
    %9 = arith.truncf %8 : vector<8x96xf32> to vector<8x96xbf16>
    %cst_8 = arith.constant 0.000000e+00 : f32
    %10 = vector.broadcast %cst_8 : f32 to vector<8x32xf32>
    %11 = vector.extract_strided_slice %9 {offsets = [0, 0], sizes = [8, 8], strides = [1, 1]} : vector<8x96xbf16> to vector<8x8xbf16>
    %12 = vector.extract_strided_slice %9 {offsets = [0, 32], sizes = [8, 8], strides = [1, 1]} : vector<8x96xbf16> to vector<8x8xbf16>
    %13 = vector.extract_strided_slice %9 {offsets = [0, 64], sizes = [8, 8], strides = [1, 1]} : vector<8x96xbf16> to vector<8x8xbf16>
    %cst_9 = arith.constant dense<0.000000e+00> : vector<8x8xf32>
    %14 = tpu.matmul %11, %12, %cst_9 {dimension_numbers = #tpu.dot_dimension_numbers<[1], [1], [0], [0], [0, 0, 1, 0], [], []>} : vector<8x8xbf16>, vector<8x8xbf16>, vector<8x8xf32> -> vector<8x8xf32>
    %cst_10 = arith.constant 0.353553385 : f32
    %15 = vector.broadcast %cst_10 : f32 to vector<8x8xf32>
    %16 = arith.mulf %14, %15 : vector<8x8xf32>
    %17 = arith.addf %16, %7 : vector<8x8xf32>
    %cst_11 = arith.constant dense<0xFF800000> : vector<8xf32>
    %18 = vector.multi_reduction <maximumf>, %17, %cst_11 [1] : vector<8x8xf32> to vector<8xf32>
    %19 = vector.shape_cast %18 : vector<8xf32> to vector<8x1xf32>
    %20 = vector.broadcast %19 : vector<8x1xf32> to vector<8x8xf32>
    %21 = arith.subf %17, %20 : vector<8x8xf32>
    %22 = math.exp %21 : vector<8x8xf32>
    %cst_12 = arith.constant dense<0.000000e+00> : vector<8xf32>
    %23 = vector.multi_reduction <add>, %22, %cst_12 [1] : vector<8x8xf32> to vector<8xf32>
    %24 = vector.shape_cast %23 : vector<8xf32> to vector<8x1xf32>
    %25 = tpu.reciprocal %24 {approx = true} : vector<8x1xf32> -> vector<8x1xf32>
    %26 = vector.broadcast %25 : vector<8x1xf32> to vector<8x8xf32>
    %27 = arith.mulf %22, %26 : vector<8x8xf32>
    %28 = arith.truncf %27 : vector<8x8xf32> to vector<8x8xbf16>
    %cst_13 = arith.constant dense<0.000000e+00> : vector<8x8xf32>
    %29 = tpu.matmul %28, %13, %cst_13 {dimension_numbers = #tpu.dot_dimension_numbers<[1], [0], [0], [1], [0, 0, 1, 1], [], []>} : vector<8x8xbf16>, vector<8x8xbf16>, vector<8x8xf32> -> vector<8x8xf32>
    %30 = arith.truncf %29 : vector<8x8xf32> to vector<8x8xbf16>
    %31 = vector.extract_strided_slice %6 {offsets = [0, 0], sizes = [8, 32], strides = [1, 1]} : vector<32x32xbf16> to vector<8x32xbf16>
    %cst_14 = arith.constant dense<0.000000e+00> : vector<8x32xf32>
    %32 = tpu.matmul %30, %31, %cst_14 {dimension_numbers = #tpu.dot_dimension_numbers<[1], [0], [0], [1], [0, 0, 1, 1], [], []>} : vector<8x8xbf16>, vector<8x32xbf16>, vector<8x32xf32> -> vector<8x32xf32>
    %33 = arith.addf %10, %32 : vector<8x32xf32>
    %34 = vector.extract_strided_slice %9 {offsets = [0, 8], sizes = [8, 8], strides = [1, 1]} : vector<8x96xbf16> to vector<8x8xbf16>
    %35 = vector.extract_strided_slice %9 {offsets = [0, 40], sizes = [8, 8], strides = [1, 1]} : vector<8x96xbf16> to vector<8x8xbf16>
    %36 = vector.extract_strided_slice %9 {offsets = [0, 72], sizes = [8, 8], strides = [1, 1]} : vector<8x96xbf16> to vector<8x8xbf16>
    %cst_15 = arith.constant dense<0.000000e+00> : vector<8x8xf32>
    %37 = tpu.matmul %34, %35, %cst_15 {dimension_numbers = #tpu.dot_dimension_numbers<[1], [1], [0], [0], [0, 0, 1, 0], [], []>} : vector<8x8xbf16>, vector<8x8xbf16>, vector<8x8xf32> -> vector<8x8xf32>
    %cst_16 = arith.constant 0.353553385 : f32
    %38 = vector.broadcast %cst_16 : f32 to vector<8x8xf32>
    %39 = arith.mulf %37, %38 : vector<8x8xf32>
    %40 = arith.addf %39, %7 : vector<8x8xf32>
    %cst_17 = arith.constant dense<0xFF800000> : vector<8xf32>
    %41 = vector.multi_reduction <maximumf>, %40, %cst_17 [1] : vector<8x8xf32> to vector<8xf32>
    %42 = vector.shape_cast %41 : vector<8xf32> to vector<8x1xf32>
    %43 = vector.broadcast %42 : vector<8x1xf32> to vector<8x8xf32>
    %44 = arith.subf %40, %43 : vector<8x8xf32>
    %45 = math.exp %44 : vector<8x8xf32>
    %cst_18 = arith.constant dense<0.000000e+00> : vector<8xf32>
    %46 = vector.multi_reduction <add>, %45, %cst_18 [1] : vector<8x8xf32> to vector<8xf32>
    %47 = vector.shape_cast %46 : vector<8xf32> to vector<8x1xf32>
    %48 = tpu.reciprocal %47 {approx = true} : vector<8x1xf32> -> vector<8x1xf32>
    %49 = vector.broadcast %48 : vector<8x1xf32> to vector<8x8xf32>
    %50 = arith.mulf %45, %49 : vector<8x8xf32>
    %51 = arith.truncf %50 : vector<8x8xf32> to vector<8x8xbf16>
    %cst_19 = arith.constant dense<0.000000e+00> : vector<8x8xf32>
    %52 = tpu.matmul %51, %36, %cst_19 {dimension_numbers = #tpu.dot_dimension_numbers<[1], [0], [0], [1], [0, 0, 1, 1], [], []>} : vector<8x8xbf16>, vector<8x8xbf16>, vector<8x8xf32> -> vector<8x8xf32>
    %53 = arith.truncf %52 : vector<8x8xf32> to vector<8x8xbf16>
    %54 = vector.extract_strided_slice %6 {offsets = [8, 0], sizes = [8, 32], strides = [1, 1]} : vector<32x32xbf16> to vector<8x32xbf16>
    %cst_20 = arith.constant dense<0.000000e+00> : vector<8x32xf32>
    %55 = tpu.matmul %53, %54, %cst_20 {dimension_numbers = #tpu.dot_dimension_numbers<[1], [0], [0], [1], [0, 0, 1, 1], [], []>} : vector<8x8xbf16>, vector<8x32xbf16>, vector<8x32xf32> -> vector<8x32xf32>
    %56 = arith.addf %33, %55 : vector<8x32xf32>
    %57 = vector.extract_strided_slice %9 {offsets = [0, 16], sizes = [8, 8], strides = [1, 1]} : vector<8x96xbf16> to vector<8x8xbf16>
    %58 = vector.extract_strided_slice %9 {offsets = [0, 48], sizes = [8, 8], strides = [1, 1]} : vector<8x96xbf16> to vector<8x8xbf16>
    %59 = vector.extract_strided_slice %9 {offsets = [0, 80], sizes = [8, 8], strides = [1, 1]} : vector<8x96xbf16> to vector<8x8xbf16>
    %cst_21 = arith.constant dense<0.000000e+00> : vector<8x8xf32>
    %60 = tpu.matmul %57, %58, %cst_21 {dimension_numbers = #tpu.dot_dimension_numbers<[1], [1], [0], [0], [0, 0, 1, 0], [], []>} : vector<8x8xbf16>, vector<8x8xbf16>, vector<8x8xf32> -> vector<8x8xf32>
    %cst_22 = arith.constant 0.353553385 : f32
    %61 = vector.broadcast %cst_22 : f32 to vector<8x8xf32>
    %62 = arith.mulf %60, %61 : vector<8x8xf32>
    %63 = arith.addf %62, %7 : vector<8x8xf32>
    %cst_23 = arith.constant dense<0xFF800000> : vector<8xf32>
    %64 = vector.multi_reduction <maximumf>, %63, %cst_23 [1] : vector<8x8xf32> to vector<8xf32>
    %65 = vector.shape_cast %64 : vector<8xf32> to vector<8x1xf32>
    %66 = vector.broadcast %65 : vector<8x1xf32> to vector<8x8xf32>
    %67 = arith.subf %63, %66 : vector<8x8xf32>
    %68 = math.exp %67 : vector<8x8xf32>
    %cst_24 = arith.constant dense<0.000000e+00> : vector<8xf32>
    %69 = vector.multi_reduction <add>, %68, %cst_24 [1] : vector<8x8xf32> to vector<8xf32>
    %70 = vector.shape_cast %69 : vector<8xf32> to vector<8x1xf32>
    %71 = tpu.reciprocal %70 {approx = true} : vector<8x1xf32> -> vector<8x1xf32>
    %72 = vector.broadcast %71 : vector<8x1xf32> to vector<8x8xf32>
    %73 = arith.mulf %68, %72 : vector<8x8xf32>
    %74 = arith.truncf %73 : vector<8x8xf32> to vector<8x8xbf16>
    %cst_25 = arith.constant dense<0.000000e+00> : vector<8x8xf32>
    %75 = tpu.matmul %74, %59, %cst_25 {dimension_numbers = #tpu.dot_dimension_numbers<[1], [0], [0], [1], [0, 0, 1, 1], [], []>} : vector<8x8xbf16>, vector<8x8xbf16>, vector<8x8xf32> -> vector<8x8xf32>
    %76 = arith.truncf %75 : vector<8x8xf32> to vector<8x8xbf16>
    %77 = vector.extract_strided_slice %6 {offsets = [16, 0], sizes = [8, 32], strides = [1, 1]} : vector<32x32xbf16> to vector<8x32xbf16>
    %cst_26 = arith.constant dense<0.000000e+00> : vector<8x32xf32>
    %78 = tpu.matmul %76, %77, %cst_26 {dimension_numbers = #tpu.dot_dimension_numbers<[1], [0], [0], [1], [0, 0, 1, 1], [], []>} : vector<8x8xbf16>, vector<8x32xbf16>, vector<8x32xf32> -> vector<8x32xf32>
    %79 = arith.addf %56, %78 : vector<8x32xf32>
    %80 = vector.extract_strided_slice %9 {offsets = [0, 24], sizes = [8, 8], strides = [1, 1]} : vector<8x96xbf16> to vector<8x8xbf16>
    %81 = vector.extract_strided_slice %9 {offsets = [0, 56], sizes = [8, 8], strides = [1, 1]} : vector<8x96xbf16> to vector<8x8xbf16>
    %82 = vector.extract_strided_slice %9 {offsets = [0, 88], sizes = [8, 8], strides = [1, 1]} : vector<8x96xbf16> to vector<8x8xbf16>
    %cst_27 = arith.constant dense<0.000000e+00> : vector<8x8xf32>
    %83 = tpu.matmul %80, %81, %cst_27 {dimension_numbers = #tpu.dot_dimension_numbers<[1], [1], [0], [0], [0, 0, 1, 0], [], []>} : vector<8x8xbf16>, vector<8x8xbf16>, vector<8x8xf32> -> vector<8x8xf32>
    %cst_28 = arith.constant 0.353553385 : f32
    %84 = vector.broadcast %cst_28 : f32 to vector<8x8xf32>
    %85 = arith.mulf %83, %84 : vector<8x8xf32>
    %86 = arith.addf %85, %7 : vector<8x8xf32>
    %cst_29 = arith.constant dense<0xFF800000> : vector<8xf32>
    %87 = vector.multi_reduction <maximumf>, %86, %cst_29 [1] : vector<8x8xf32> to vector<8xf32>
    %88 = vector.shape_cast %87 : vector<8xf32> to vector<8x1xf32>
    %89 = vector.broadcast %88 : vector<8x1xf32> to vector<8x8xf32>
    %90 = arith.subf %86, %89 : vector<8x8xf32>
    %91 = math.exp %90 : vector<8x8xf32>
    %cst_30 = arith.constant dense<0.000000e+00> : vector<8xf32>
    %92 = vector.multi_reduction <add>, %91, %cst_30 [1] : vector<8x8xf32> to vector<8xf32>
    %93 = vector.shape_cast %92 : vector<8xf32> to vector<8x1xf32>
    %94 = tpu.reciprocal %93 {approx = true} : vector<8x1xf32> -> vector<8x1xf32>
    %95 = vector.broadcast %94 : vector<8x1xf32> to vector<8x8xf32>
    %96 = arith.mulf %91, %95 : vector<8x8xf32>
    %97 = arith.truncf %96 : vector<8x8xf32> to vector<8x8xbf16>
    %cst_31 = arith.constant dense<0.000000e+00> : vector<8x8xf32>
    %98 = tpu.matmul %97, %82, %cst_31 {dimension_numbers = #tpu.dot_dimension_numbers<[1], [0], [0], [1], [0, 0, 1, 1], [], []>} : vector<8x8xbf16>, vector<8x8xbf16>, vector<8x8xf32> -> vector<8x8xf32>
    %99 = arith.truncf %98 : vector<8x8xf32> to vector<8x8xbf16>
    %100 = vector.extract_strided_slice %6 {offsets = [24, 0], sizes = [8, 32], strides = [1, 1]} : vector<32x32xbf16> to vector<8x32xbf16>
    %cst_32 = arith.constant dense<0.000000e+00> : vector<8x32xf32>
    %101 = tpu.matmul %99, %100, %cst_32 {dimension_numbers = #tpu.dot_dimension_numbers<[1], [0], [0], [1], [0, 0, 1, 1], [], []>} : vector<8x8xbf16>, vector<8x32xbf16>, vector<8x32xf32> -> vector<8x32xf32>
    %102 = arith.addf %79, %101 : vector<8x32xf32>
    %c0_33 = arith.constant 0 : index
    %c0_34 = arith.constant 0 : index
    %103 = vector.load %arg5[%c0_33, %c0_34] : memref<1x32xf32, #tpu.memory_space<vmem>>, vector<1x32xf32>
    %104 = vector.broadcast %103 : vector<1x32xf32> to vector<8x32xf32>
    %105 = arith.addf %102, %104 : vector<8x32xf32>
    %c0_35 = arith.constant 0 : index
    %c0_36 = arith.constant 0 : index
    %c0_37 = arith.constant 0 : index
    %106 = vector.load %arg6[%c0_35, %c0_36, %c0_37] : memref<1x8x32xf32, #tpu.memory_space<vmem>>, vector<1x8x32xf32>
    %107 = vector.shape_cast %106 : vector<1x8x32xf32> to vector<8x32xf32>
    %108 = vector.shape_cast %105 : vector<8x32xf32> to vector<1x8x32xf32>
    tpu.vector_store %arg6[%c0_35, %c0_36, %c0_37], %108 {strides = array<i32>} : memref<1x8x32xf32, #tpu.memory_space<vmem>>, vector<1x8x32xf32>,
    return
  }
  func.func @transform_0(%arg0: i32) -> (i32, i32, i32) {
    %c0_i32 = arith.constant 0 : i32
    %c0_i32_0 = arith.constant 0 : i32
    %c0_i32_1 = arith.constant 0 : i32
    return %arg0, %c0_i32, %c0_i32_0 : i32, i32, i32
  }
  func.func @transform_1(%arg0: i32) -> (i32, i32) {
    %c0_i32 = arith.constant 0 : i32
    %c0_i32_0 = arith.constant 0 : i32
    %c0_i32_1 = arith.constant 0 : i32
    return %c0_i32, %c0_i32_0 : i32, i32
  }
  func.func @transform_2(%arg0: i32) -> (i32, i32) {
    %c0_i32 = arith.constant 0 : i32
    %c0_i32_0 = arith.constant 0 : i32
    %c0_i32_1 = arith.constant 0 : i32
    return %c0_i32, %c0_i32_0 : i32, i32
  }
  func.func @transform_3(%arg0: i32) -> (i32, i32) {
    %c0_i32 = arith.constant 0 : i32
    %c0_i32_0 = arith.constant 0 : i32
    %c0_i32_1 = arith.constant 0 : i32
    return %c0_i32, %c0_i32_0 : i32, i32
  }
  func.func @transform_4(%arg0: i32) -> (i32, i32) {
    %c0_i32 = arith.constant 0 : i32
    %c0_i32_0 = arith.constant 0 : i32
    %c0_i32_1 = arith.constant 0 : i32
    return %c0_i32, %c0_i32_0 : i32, i32
  }
  func.func @transform_5(%arg0: i32) -> (i32, i32, i32) {
    %c0_i32 = arith.constant 0 : i32
    %c0_i32_0 = arith.constant 0 : i32
    %c0_i32_1 = arith.constant 0 : i32
    return %arg0, %c0_i32, %c0_i32_0 : i32, i32, i32
  }
}

</mosaic_0001>

<llo_original>
// kernel: multi_head_attention.1
$region0: #{multi_head_attention.1}
  #allocation0 [shape = 'u32[]', space=smem, size = 0x4, offset = 0x4, fixed_abs, tag = 'smem constant byte address 0x4 - core index']
  #allocation1 [shape = 'u32[144,128]{1,0:T(1,128)}', space=vmem, size = 0x12000, scoped, tag = 'internal scratch']
  %s0 = inlined_call_operand.hbm [shape: f32[2,8,32], index: 0, kind: input, shape index: {}]
  %s1 = inlined_call_operand.vmem [shape: f32[8,8], index: 1, kind: input, shape index: {}]
  %s2 = inlined_call_operand.hbm [shape: f32[32,96], index: 2, kind: input, shape index: {}]
  %s3 = inlined_call_operand.hbm [shape: f32[32,32], index: 3, kind: input, shape index: {}]
  %s4 = inlined_call_operand.vmem [shape: f32[1,32], index: 4, kind: input, shape index: {}]
  %s5 = inlined_call_operand.hbm [shape: f32[2,8,32], index: 5, kind: output, shape index: {}]
  %s6 = sld [smem:[#allocation0]]
  $region65: #{multi_head_attention.1} parent=0
    _
  %s8 = ssub.s32 1, %s6
  %s9 = scalar_select 0, %s8, %s6
  $region1: #{multi_head_attention.1} parent=0
    #allocation2 [shape = 'u8[8192]{0}', space=vmem, size = 0x2000, scoped, tag = 'input window, operand 0']
    #allocation3 [shape = 's32[2]{0}', space=sflag, size = 0x8, scoped, tag = 'scoped memory for multi_head_attention.1']
    #allocation4 [shape = 's32[2]{0}', space=sflag, size = 0x8, scoped, tag = 'scoped memory for multi_head_attention.1']
    #allocation5 [shape = 'u8[16384]{0}', space=vmem, size = 0x4000, scoped, tag = 'input window, operand 2, single buffered']
    #allocation6 [shape = 's32[1]{0}', space=sflag, size = 0x4, scoped, tag = 'scoped memory for multi_head_attention.1']
    #allocation7 [shape = 'u8[16384]{0}', space=vmem, size = 0x4000, scoped, tag = 'input window, operand 3, single buffered']
    #allocation8 [shape = 'u8[8192]{0}', space=vmem, size = 0x2000, scoped, tag = 'output window, operand 0']
    %10 = vsyncpa [#allocation3], 0
    %s11 = scalar_lea.sflag [#allocation3], 1
    %12 = vsyncpa %s11, 0
    %13 = vsyncpa [#allocation6], 0
    %14 = vsyncpa [#allocation4], 0
    %s15 = scalar_lea.sflag [#allocation4], 1
    %16 = vsyncpa %s15, 0
    loop: start=0, step=1, limit=4
    $region2: #{multi_head_attention.1} parent=1 // loop_pre_header
      _
    $region3: #{multi_head_attention.1} parent=1 // loop_header
      %s18 = sphi 0, %s22
      %p19 = scmp.ge.s32.totalorder %s18, 4
      %s28 = sphi 0, %s30
      %s31 = sphi 0, %s28
      %s32 = sphi 0, %s31
      %s48 = sphi 0, %s32
      %s52 = sphi 0, %s52
      %s54 = sphi 0, %s52
      %s55 = sphi 0, %s54
      %s69 = sphi 0, %s55
      %s73 = sphi 0, %s73
      %s75 = sphi 0, %s73
      %s76 = sphi 0, %s75
      %s90 = sphi 0, %s76
      %s94 = sphi 0, %s94
      %s96 = sphi 0, %s94
      %s97 = sphi 0, %s96
      %s111 = sphi 0, %s97
      %s115 = sphi 0, %s115
      %s117 = sphi 0, %s115
      %s118 = sphi 0, %s117
      %s132 = sphi 0, %s118
      %s138 = sphi 0, %s140
      %s141 = sphi 0, %s138
      %s142 = sphi 0, %s141
      %s158 = sphi 0, %s142
    $region4: #{multi_head_attention.1} parent=1 // loop_header_branch
      %21 = sbr.rel (%p19) target = $region8
    $region5: #{multi_head_attention.1} parent=1 // loop_body
      %s23 = ssub.s32 %s18, 1
      %s24 = ssub.s32 %s18, 2
      %s25 = sadd.s32 %s18, 1
      %s26 = ssub.s32 %s18, %s25
      %p27 = scmp.eq.s32.totalorder %s26, 0
      %s29 = sadd.s32 %s28, 1
      %s30 = scalar_select %p27, %s28, %s29
      %p33 = pneg %p27
      %p34 = scmp.eq.s32.totalorder %s18, 1
      %p35 = por %p33, %p34
      %p36 = scmp.ne.s32.totalorder %s28, %s31
      %p37 = scmp.eq.s32.totalorder %s18, 0
      %p38 = por %p36, %p37
      %p39 = scmp.ne.s32.totalorder %s28, %s31
      %p40 = scmp.eq.s32.totalorder %s23, 1
      %p41 = por %p39, %p40
      %p42 = scmp.ne.s32.totalorder %s31, %s32
      %p43 = scmp.eq.s32.totalorder %s23, 0
      %p44 = por %p42, %p43
      %p45 = scmp.ne.s32.totalorder %s31, %s32
      %p46 = scmp.eq.s32.totalorder %s24, 1
      %p47 = por %p45, %p46
      %p49 = scmp.ne.s32.totalorder %s32, %s48
      %p50 = scmp.eq.s32.totalorder %s24, 0
      %p51 = por %p49, %p50
      %s53 = sadd.s32 %s52, 1
      %p56 = scmp.eq.s32.totalorder %s18, 1
      %p57 = scmp.ne.s32.totalorder %s52, %s54
      %p58 = scmp.eq.s32.totalorder %s18, 0
      %p59 = por %p57, %p58
      %p60 = scmp.ne.s32.totalorder %s52, %s54
      %p61 = scmp.eq.s32.totalorder %s23, 1
      %p62 = por %p60, %p61
      %p63 = scmp.ne.s32.totalorder %s54, %s55
      %p64 = scmp.eq.s32.totalorder %s23, 0
      %p65 = por %p63, %p64
      %p66 = scmp.ne.s32.totalorder %s54, %s55
      %p67 = scmp.eq.s32.totalorder %s24, 1
      %p68 = por %p66, %p67
      %p70 = scmp.ne.s32.totalorder %s55, %s69
      %p71 = scmp.eq.s32.totalorder %s24, 0
      %p72 = por %p70, %p71
      %s74 = sadd.s32 %s73, 1
      %p77 = scmp.eq.s32.totalorder %s18, 1
      %p78 = scmp.ne.s32.totalorder %s73, %s75
      %p79 = scmp.eq.s32.totalorder %s18, 0
      %p80 = por %p78, %p79
      %p81 = scmp.ne.s32.totalorder %s73, %s75
      %p82 = scmp.eq.s32.totalorder %s23, 1
      %p83 = por %p81, %p82
      %p84 = scmp.ne.s32.totalorder %s75, %s76
      %p85 = scmp.eq.s32.totalorder %s23, 0
      %p86 = por %p84, %p85
      %p87 = scmp.ne.s32.totalorder %s75, %s76
      %p88 = scmp.eq.s32.totalorder %s24, 1
      %p89 = por %p87, %p88
      %p91 = scmp.ne.s32.totalorder %s76, %s90
      %p92 = scmp.eq.s32.totalorder %s24, 0
      %p93 = por %p91, %p92
      %s95 = sadd.s32 %s94, 1
      %p98 = scmp.eq.s32.totalorder %s18, 1
      %p99 = scmp.ne.s32.totalorder %s94, %s96
      %p100 = scmp.eq.s32.totalorder %s18, 0
      %p101 = por %p99, %p100
      %p102 = scmp.ne.s32.totalorder %s94, %s96
      %p103 = scmp.eq.s32.totalorder %s23, 1
      %p104 = por %p102, %p103
      %p105 = scmp.ne.s32.totalorder %s96, %s97
      %p106 = scmp.eq.s32.totalorder %s23, 0
      %p107 = por %p105, %p106
      %p108 = scmp.ne.s32.totalorder %s96, %s97
      %p109 = scmp.eq.s32.totalorder %s24, 1
      %p110 = por %p108, %p109
      %p112 = scmp.ne.s32.totalorder %s97, %s111
      %p113 = scmp.eq.s32.totalorder %s24, 0
      %p114 = por %p112, %p113
      %s116 = sadd.s32 %s115, 1
      %p119 = scmp.eq.s32.totalorder %s18, 1
      %p120 = scmp.ne.s32.totalorder %s115, %s117
      %p121 = scmp.eq.s32.totalorder %s18, 0
      %p122 = por %p120, %p121
      %p123 = scmp.ne.s32.totalorder %s115, %s117
      %p124 = scmp.eq.s32.totalorder %s23, 1
      %p125 = por %p123, %p124
      %p126 = scmp.ne.s32.totalorder %s117, %s118
      %p127 = scmp.eq.s32.totalorder %s23, 0
      %p128 = por %p126, %p127
      %p129 = scmp.ne.s32.totalorder %s117, %s118
      %p130 = scmp.eq.s32.totalorder %s24, 1
      %p131 = por %p129, %p130
      %p133 = scmp.ne.s32.totalorder %s118, %s132
      %p134 = scmp.eq.s32.totalorder %s24, 0
      %p135 = por %p133, %p134
      %s136 = ssub.s32 %s18, %s25
      %p137 = scmp.eq.s32.totalorder %s136, 0
      %s139 = sadd.s32 %s138, 1
      %s140 = scalar_select %p137, %s138, %s139
      %p143 = pneg %p137
      %p144 = scmp.eq.s32.totalorder %s18, 1
      %p145 = por %p143, %p144
      %p146 = scmp.ne.s32.totalorder %s138, %s141
      %p147 = scmp.eq.s32.totalorder %s18, 0
      %p148 = por %p146, %p147
      %p149 = scmp.ne.s32.totalorder %s138, %s141
      %p150 = scmp.eq.s32.totalorder %s23, 1
      %p151 = por %p149, %p150
      %p152 = scmp.ne.s32.totalorder %s141, %s142
      %p153 = scmp.eq.s32.totalorder %s23, 0
      %p154 = por %p152, %p153
      %p155 = scmp.ne.s32.totalorder %s141, %s142
      %p156 = scmp.eq.s32.totalorder %s24, 1
      %p157 = por %p155, %p156
      %p159 = scmp.ne.s32.totalorder %s142, %s158
      %p160 = scmp.eq.s32.totalorder %s24, 0
      %p161 = por %p159, %p160
      %p162 = scmp.le.s32.totalorder 1, %s18
      %p163 = scmp.lt.s32.totalorder %s18, 3
      %p164 = pnand %p162, %p163
      %p165 = pneg %p164
      // Predicated region
      $region9: #{multi_head_attention.1} parent=5 // pred_check
        _
      $region10: #{multi_head_attention.1} parent=5 // pred_check_branch
        %167 = sbr.rel (%p164) target = $region12
      $region11: #{multi_head_attention.1} parent=5 // pred_region
        %s168 = ssub.s32 %s18, 1
        // Predicated region
        $region13: #{multi_head_attention.1} parent=11 // pred_check
          %p169 = pneg %p65
        $region14: #{multi_head_attention.1} parent=11 // pred_check_branch
          %171 = sbr.rel (%p169) target = $region16
        $region15: #{multi_head_attention.1} parent=11 // pred_region
          _
        $region16: #{multi_head_attention.1} parent=11 // pred_fallthru
          _
        // Predicated region
        $region17: #{multi_head_attention.1} parent=11 // pred_check
          %p172 = pneg %p86
        $region18: #{multi_head_attention.1} parent=11 // pred_check_branch
          %174 = sbr.rel (%p172) target = $region20
        $region19: #{multi_head_attention.1} parent=11 // pred_region
          %s176 = ssub.s32 512, 512
          %177 = vsyncadd [#allocation6], %s176
          %s178 = sshll.u32 [#allocation5], 4
          %s179 = int_to_ptr.vmem [resolvable:$true] %s178
          %184 = dma.hbm_to_vmem [thread:$0]  %s2, 512, %s179, [#allocation6], 128, 128, 8
        $region20: #{multi_head_attention.1} parent=11 // pred_fallthru
          _
        // Predicated region
        $region21: #{multi_head_attention.1} parent=11 // pred_check
          %p185 = pneg %p107
        $region22: #{multi_head_attention.1} parent=11 // pred_check_branch
          %187 = sbr.rel (%p185) target = $region24
        $region23: #{multi_head_attention.1} parent=11 // pred_region
          %s189 = ssub.s32 512, 512
          %190 = vsyncadd [#allocation6], %s189
          %s191 = sshll.u32 [#allocation7], 4
          %s192 = int_to_ptr.vmem [resolvable:$true] %s191
          %197 = dma.hbm_to_vmem [thread:$0]  %s3, 512, %s192, [#allocation6], 128, 128, 8
        $region24: #{multi_head_attention.1} parent=11 // pred_fallthru
          _
        // Predicated region
        $region25: #{multi_head_attention.1} parent=11 // pred_check
          %p198 = pneg %p128
        $region26: #{multi_head_attention.1} parent=11 // pred_check_branch
          %200 = sbr.rel (%p198) target = $region28
        $region27: #{multi_head_attention.1} parent=11 // pred_region
          _
        $region28: #{multi_head_attention.1} parent=11 // pred_fallthru
          _
      $region12: #{multi_head_attention.1} parent=5 // pred_fallthru
        _
      %p201 = scmp.lt.s32.totalorder %s18, 2
      // Predicated region
      $region29: #{multi_head_attention.1} parent=5 // pred_check
        %p202 = pneg %p201
      $region30: #{multi_head_attention.1} parent=5 // pred_check_branch
        %204 = sbr.rel (%p202) target = $region32
      $region31: #{multi_head_attention.1} parent=5 // pred_region
        // Predicated region
        $region33: #{multi_head_attention.1} parent=31 // pred_check
          %p205 = pneg %p38
        $region34: #{multi_head_attention.1} parent=31 // pred_check_branch
          %207 = sbr.rel (%p205) target = $region36
        $region35: #{multi_head_attention.1} parent=31 // pred_region
          %s208 = sand.u32 %s28, 1
          %s209 = scalar_lea.sflag [#allocation3], %s208
          %s210 = sand.u32 %s28, 1
          %s211 = smul.addr %s210, 8
          %s212 = scalar_lea.vmem [#allocation2], %s211
          %s214 = ssub.s32 128, 128
          %215 = vsyncadd %s209, %s214
          %s216 = smul.addr %s18, 128
          %s217 = scalar_lea.hbm %s0, %s216
          %s219 = sshll.u32 %s212, 4
          %s220 = int_to_ptr.vmem [resolvable:$true] %s219
          %222 = dma.hbm_to_vmem [thread:$0]  %s217, 128, %s220, %s209
        $region36: #{multi_head_attention.1} parent=31 // pred_fallthru
          _
      $region32: #{multi_head_attention.1} parent=5 // pred_fallthru
        _
      %p223 = scmp.le.s32.totalorder 1, %s18
      %p224 = scmp.lt.s32.totalorder %s18, 3
      %p225 = pnand %p223, %p224
      %p226 = pneg %p225
      // Predicated region
      $region37: #{multi_head_attention.1} parent=5 // pred_check
        _
      $region38: #{multi_head_attention.1} parent=5 // pred_check_branch
        %228 = sbr.rel (%p225) target = $region40
      $region39: #{multi_head_attention.1} parent=5 // pred_region
        %s229 = ssub.s32 %s18, 1
        %s230 = sand.u32 %s31, 1
        %s231 = scalar_lea.sflag [#allocation3], %s230
        %s232 = sand.u32 %s31, 1
        %s233 = smul.addr %s232, 8
        %s234 = scalar_lea.vmem [#allocation2], %s233
        // Predicated region
        $region41: #{multi_head_attention.1} parent=39 // pred_check
          %p235 = pneg %p44
        $region42: #{multi_head_attention.1} parent=39 // pred_check_branch
          %237 = sbr.rel (%p235) target = $region44
        $region43: #{multi_head_attention.1} parent=39 // pred_region
          %238 = dma.done %s231, 128
        $region44: #{multi_head_attention.1} parent=39 // pred_fallthru
          _
        // Predicated region
        $region45: #{multi_head_attention.1} parent=39 // pred_check
          %p239 = pneg %p86
        $region46: #{multi_head_attention.1} parent=39 // pred_check_branch
          %241 = sbr.rel (%p239) target = $region48
        $region47: #{multi_head_attention.1} parent=39 // pred_region
          %242 = dma.done [#allocation6], 512
        $region48: #{multi_head_attention.1} parent=39 // pred_fallthru
          _
        // Predicated region
        $region49: #{multi_head_attention.1} parent=39 // pred_check
          %p243 = pneg %p107
        $region50: #{multi_head_attention.1} parent=39 // pred_check_branch
          %245 = sbr.rel (%p243) target = $region52
        $region51: #{multi_head_attention.1} parent=39 // pred_region
          %246 = dma.done [#allocation6], 512
        $region52: #{multi_head_attention.1} parent=39 // pred_fallthru
          _
        %s247 = sand.u32 %s31, 1
        %s248 = scalar_lea.sflag [#allocation3], %s247
        %s249 = sand.u32 %s31, 1
        %s250 = smul.addr %s249, 8
        %s251 = scalar_lea.vmem [#allocation2], %s250
        %p252 = pneg %p44
        %p253 = pneg %p41
        %p254 = pneg %p65
        %p255 = pneg %p62
        %p256 = pneg %p86
        %p257 = pneg %p83
        %p258 = pneg %p107
        %p259 = pneg %p104
        %p260 = pneg %p128
        %p261 = pneg %p125
        %p262 = pneg %p154
        %p263 = pneg %p151
        %s264 = sand.u32 %s141, 1
        %s265 = scalar_lea.sflag [#allocation4], %s264
        %s266 = sand.u32 %s141, 1
        %s267 = smul.addr %s266, 8
        %s268 = scalar_lea.vmem [#allocation8], %s267
        %v270 = vld [vmem:[%s234] sm:$0xff]
        %v271 = vpack.c.bf16 %v270, %v270
        %v272 = vld [vmem:[#allocation5] sm:$0xff]
        %v273 = vld [vmem:[#allocation5 + $0x8] sm:$0xff]
        %v274 = vld [vmem:[#allocation5 + $0x10] sm:$0xff]
        %v275 = vld [vmem:[#allocation5 + $0x18] sm:$0xff]
        %v276 = vpack.c.bf16 %v273, %v272
        %v277 = vpack.c.bf16 %v275, %v274
        %v278 = vld [vmem:[#allocation7] sm:$0xff]
        %v279 = vld [vmem:[#allocation7 + $0x8] sm:$0xff]
        %v280 = vld [vmem:[#allocation7 + $0x10] sm:$0xff]
        %v281 = vld [vmem:[#allocation7 + $0x18] sm:$0xff]
        %v282 = vpack.c.bf16 %v279, %v278
        %v283 = vpack.c.bf16 %v281, %v280
        %v284 = vld [vmem:[%s1] sm:$0xff]
        %vm285 = vcmask 261120
        %v287 = vsel %vm285, %v271, 0
        %289 = vmatprep.subr.bf16.mxu0 0
        %290 = vmatpush1.bf16.msra.mxu0 %v276
        %291 = vmatprep.subr.bf16.mxu0 0
        %292 = vmatpush1.bf16.msra.mxu0 %v277
        %293 = vmatprep.subr.bf16.mxu0 0
        %294 = vmatpush1.bf16.msra.mxu0 0
        %295 = vmatprep.subr.bf16.mxu0 0
        %296 = vmatpush1.bf16.msra.mxu0 0
        %297 = vmatprep.subr.bf16.mxu0 0
        %298 = vmatpush1.bf16.msra.mxu0 0
        %299 = vmatprep.subr.bf16.mxu0 0
        %300 = vmatpush1.bf16.msra.mxu0 0
        %301 = vmatprep.subr.bf16.mxu0 0
        %302 = vmatpush1.bf16.msra.mxu0 0
        %303 = vmatprep.subr.bf16.mxu0 0
        %304 = vmatpush1.bf16.msra.mxu0 0
        %305 = vmatprep.subr.bf16.mxu0 0
        %306 = vmatpush1.bf16.msra.mxu0 0
        %307 = vmatprep.subr.bf16.mxu0 0
        %308 = vmatpush1.bf16.msra.mxu0 0
        %309 = vmatprep.subr.bf16.mxu0 0
        %310 = vmatpush1.bf16.msra.mxu0 0
        %311 = vmatprep.subr.bf16.mxu0 0
        %312 = vmatpush1.bf16.msra.mxu0 0
        %313 = vmatprep.subr.bf16.mxu0 0
        %314 = vmatpush1.bf16.msra.mxu0 0
        %315 = vmatprep.subr.bf16.mxu0 0
        %316 = vmatpush1.bf16.msra.mxu0 0
        %317 = vmatprep.subr.bf16.mxu0 0
        %318 = vmatpush1.bf16.msra.mxu0 0
        %319 = vmatprep.subr.bf16.mxu0 0
        %320 = vmatpush1.bf16.msra.mxu0 0
        %321 = vmatprep.mubr.bf16.mxu0 0
        %322 = vmatmul.mubr.bf16.gmra.mrb[0].mxu0 %v287
        %v323 = vpop.f32.mrb[0].mxu0
        %v324 = vadd.f32 0.0, %v323
        %v325 = vpop.f32.mrb[0].mxu0
        %v326 = vpop.f32.mrb[0].mxu0
        %v327 = vpop.f32.mrb[0].mxu0
        %328 = vdwg.mxu0
        %v329 = vpack.c.bf16 %v324, %v324
        %331 = vrot.lane.b32.xlu0 %v329, 96
        %v332 = vpop.permute.xlu0 %331
        %vm333 = vcmask 64512
        %v335 = vsel %vm333, %v329, 0
        %v338 = vsel %vm333, %v332, 0
        %340 = vmatprep.subr.bf16.mxu0 0
        %341 = vmatpush1.bf16.xpose.msra.mxu0 %v338
        %342 = vmatprep.subr.bf16.mxu0 0
        %343 = vmatpush1.bf16.xpose.msra.mxu0 0
        %344 = vmatprep.subr.bf16.mxu0 0
        %345 = vmatpush1.bf16.xpose.msra.mxu0 0
        %346 = vmatprep.subr.bf16.mxu0 0
        %347 = vmatpush1.bf16.xpose.msra.mxu0 0
        %348 = vmatprep.subr.bf16.mxu0 0
        %349 = vmatpush1.bf16.xpose.msra.mxu0 0
        %350 = vmatprep.subr.bf16.mxu0 0
        %351 = vmatpush1.bf16.xpose.msra.mxu0 0
        %352 = vmatprep.subr.bf16.mxu0 0
        %353 = vmatpush1.bf16.xpose.msra.mxu0 0
        %354 = vmatprep.subr.bf16.mxu0 0
        %355 = vmatpush1.bf16.xpose.msra.mxu0 0
        %356 = vmatprep.subr.bf16.mxu0 0
        %357 = vmatpush1.bf16.xpose.msra.mxu0 0
        %358 = vmatprep.subr.bf16.mxu0 0
        %359 = vmatpush1.bf16.xpose.msra.mxu0 0
        %360 = vmatprep.subr.bf16.mxu0 0
        %361 = vmatpush1.bf16.xpose.msra.mxu0 0
        %362 = vmatprep.subr.bf16.mxu0 0
        %363 = vmatpush1.bf16.xpose.msra.mxu0 0
        %364 = vmatprep.subr.bf16.mxu0 0
        %365 = vmatpush1.bf16.xpose.msra.mxu0 0
        %366 = vmatprep.subr.bf16.mxu0 0
        %367 = vmatpush1.bf16.xpose.msra.mxu0 0
        %368 = vmatprep.subr.bf16.mxu0 0
        %369 = vmatpush1.bf16.xpose.msra.mxu0 0
        %370 = vmatprep.subr.bf16.mxu0 0
        %371 = vmatpush1.bf16.xpose.msra.mxu0 0
        %372 = vmatprep.mubr.bf16.mxu0 0
        %373 = vmatmul.mubr.bf16.gmra.mrb[0].mxu0 %v335
        %v374 = vpop.f32.mrb[0].mxu0
        %v375 = vadd.f32 0.0, %v374
        %v376 = vpop.f32.mrb[0].mxu0
        %v377 = vpop.f32.mrb[0].mxu0
        %v378 = vpop.f32.mrb[0].mxu0
        %379 = vdwg.mxu0
        %v380 = vmul.f32 %v375, 0.35355338
        %v381 = vadd.f32 %v380, %v284
        %v382 = vsel %vm333, %v381, -inf
        %383 = vmax.xlane.f32.xlu0 %v382
        %v384 = vpop.xlane.xlu0 %383
        %v385 = vsub.f32 %v381, %v384
        %v386 = vmul.f32 %v385, 1.442695
        %v387 = vpow.pop %v386
        %v388 = vsel %vm333, %v387, 0.0
        %389 = vadd.xlane.f32.xlu0 %v388
        %v390 = vpop.xlane.xlu0 %389
        %v391 = vrcp.pop %v390
        %v392 = vmul.f32 %v387, %v391
        %v393 = vpack.c.bf16 %v392, %v392
        %394 = vrot.lane.b32.xlu0 %v329, 64
        %v395 = vpop.permute.xlu0 %394
        %v397 = vsel %vm333, %v393, 0
        %vm399 = vcmask 1043456
        %v401 = vsel %vm399, %v395, 0
        %403 = vmatprep.subr.bf16.mxu0 0
        %404 = vmatpush1.bf16.msra.mxu0 %v401
        %405 = vmatprep.subr.bf16.mxu0 0
        %406 = vmatpush1.bf16.msra.mxu0 0
        %407 = vmatprep.subr.bf16.mxu0 0
        %408 = vmatpush1.bf16.msra.mxu0 0
        %409 = vmatprep.subr.bf16.mxu0 0
        %410 = vmatpush1.bf16.msra.mxu0 0
        %411 = vmatprep.subr.bf16.mxu0 0
        %412 = vmatpush1.bf16.msra.mxu0 0
        %413 = vmatprep.subr.bf16.mxu0 0
        %414 = vmatpush1.bf16.msra.mxu0 0
        %415 = vmatprep.subr.bf16.mxu0 0
        %416 = vmatpush1.bf16.msra.mxu0 0
        %417 = vmatprep.subr.bf16.mxu0 0
        %418 = vmatpush1.bf16.msra.mxu0 0
        %419 = vmatprep.subr.bf16.mxu0 0
        %420 = vmatpush1.bf16.msra.mxu0 0
        %421 = vmatprep.subr.bf16.mxu0 0
        %422 = vmatpush1.bf16.msra.mxu0 0
        %423 = vmatprep.subr.bf16.mxu0 0
        %424 = vmatpush1.bf16.msra.mxu0 0
        %425 = vmatprep.subr.bf16.mxu0 0
        %426 = vmatpush1.bf16.msra.mxu0 0
        %427 = vmatprep.subr.bf16.mxu0 0
        %428 = vmatpush1.bf16.msra.mxu0 0
        %429 = vmatprep.subr.bf16.mxu0 0
        %430 = vmatpush1.bf16.msra.mxu0 0
        %431 = vmatprep.subr.bf16.mxu0 0
        %432 = vmatpush1.bf16.msra.mxu0 0
        %433 = vmatprep.subr.bf16.mxu0 0
        %434 = vmatpush1.bf16.msra.mxu0 0
        %435 = vmatprep.mubr.bf16.mxu0 0
        %436 = vmatmul.mubr.bf16.gmra.mrb[0].mxu0 %v397
        %v437 = vpop.f32.mrb[0].mxu0
        %v438 = vadd.f32 0.0, %v437
        %v439 = vpop.f32.mrb[0].mxu0
        %v440 = vpop.f32.mrb[0].mxu0
        %v441 = vpop.f32.mrb[0].mxu0
        %442 = vdwg.mxu0
        %v443 = vpack.c.bf16 %v438, %v438
        %444 = vrot.lane.b32.xlu0 %v329, 120
        %v445 = vpop.permute.xlu0 %444
        %446 = vrot.lane.b32.xlu0 %v329, 88
        %v447 = vpop.permute.xlu0 %446
        %v449 = vsel %vm333, %v445, 0
        %v452 = vsel %vm333, %v447, 0
        %454 = vmatprep.subr.bf16.mxu0 0
        %455 = vmatpush1.bf16.xpose.msra.mxu0 %v452
        %456 = vmatprep.subr.bf16.mxu0 0
        %457 = vmatpush1.bf16.xpose.msra.mxu0 0
        %458 = vmatprep.subr.bf16.mxu0 0
        %459 = vmatpush1.bf16.xpose.msra.mxu0 0
        %460 = vmatprep.subr.bf16.mxu0 0
        %461 = vmatpush1.bf16.xpose.msra.mxu0 0
        %462 = vmatprep.subr.bf16.mxu0 0
        %463 = vmatpush1.bf16.xpose.msra.mxu0 0
        %464 = vmatprep.subr.bf16.mxu0 0
        %465 = vmatpush1.bf16.xpose.msra.mxu0 0
        %466 = vmatprep.subr.bf16.mxu0 0
        %467 = vmatpush1.bf16.xpose.msra.mxu0 0
        %468 = vmatprep.subr.bf16.mxu0 0
        %469 = vmatpush1.bf16.xpose.msra.mxu0 0
        %470 = vmatprep.subr.bf16.mxu0 0
        %471 = vmatpush1.bf16.xpose.msra.mxu0 0
        %472 = vmatprep.subr.bf16.mxu0 0
        %473 = vmatpush1.bf16.xpose.msra.mxu0 0
        %474 = vmatprep.subr.bf16.mxu0 0
        %475 = vmatpush1.bf16.xpose.msra.mxu0 0
        %476 = vmatprep.subr.bf16.mxu0 0
        %477 = vmatpush1.bf16.xpose.msra.mxu0 0
        %478 = vmatprep.subr.bf16.mxu0 0
        %479 = vmatpush1.bf16.xpose.msra.mxu0 0
        %480 = vmatprep.subr.bf16.mxu0 0
        %481 = vmatpush1.bf16.xpose.msra.mxu0 0
        %482 = vmatprep.subr.bf16.mxu0 0
        %483 = vmatpush1.bf16.xpose.msra.mxu0 0
        %484 = vmatprep.subr.bf16.mxu0 0
        %485 = vmatpush1.bf16.xpose.msra.mxu0 0
        %486 = vmatprep.mubr.bf16.mxu0 0
        %487 = vmatmul.mubr.bf16.gmra.mrb[0].mxu0 %v449
        %v488 = vpop.f32.mrb[0].mxu0
        %v489 = vadd.f32 0.0, %v488
        %v490 = vpop.f32.mrb[0].mxu0
        %v491 = vpop.f32.mrb[0].mxu0
        %v492 = vpop.f32.mrb[0].mxu0
        %493 = vdwg.mxu0
        %v494 = vmul.f32 %v489, 0.35355338
        %v495 = vadd.f32 %v494, %v284
        %v496 = vsel %vm333, %v495, -inf
        %497 = vmax.xlane.f32.xlu0 %v496
        %v498 = vpop.xlane.xlu0 %497
        %v499 = vsub.f32 %v495, %v498
        %v500 = vmul.f32 %v499, 1.442695
        %v501 = vpow.pop %v500
        %v502 = vsel %vm333, %v501, 0.0
        %503 = vadd.xlane.f32.xlu0 %v502
        %v504 = vpop.xlane.xlu0 %503
        %v505 = vrcp.pop %v504
        %v506 = vmul.f32 %v501, %v505
        %v507 = vpack.c.bf16 %v506, %v506
        %508 = vrot.lane.b32.xlu0 %v329, 56
        %v509 = vpop.permute.xlu0 %508
        %v511 = vsel %vm333, %v507, 0
        %v514 = vsel %vm399, %v509, 0
        %516 = vmatprep.subr.bf16.mxu0 0
        %517 = vmatpush1.bf16.msra.mxu0 %v514
        %518 = vmatprep.subr.bf16.mxu0 0
        %519 = vmatpush1.bf16.msra.mxu0 0
        %520 = vmatprep.subr.bf16.mxu0 0
        %521 = vmatpush1.bf16.msra.mxu0 0
        %522 = vmatprep.subr.bf16.mxu0 0
        %523 = vmatpush1.bf16.msra.mxu0 0
        %524 = vmatprep.subr.bf16.mxu0 0
        %525 = vmatpush1.bf16.msra.mxu0 0
        %526 = vmatprep.subr.bf16.mxu0 0
        %527 = vmatpush1.bf16.msra.mxu0 0
        %528 = vmatprep.subr.bf16.mxu0 0
        %529 = vmatpush1.bf16.msra.mxu0 0
        %530 = vmatprep.subr.bf16.mxu0 0
        %531 = vmatpush1.bf16.msra.mxu0 0
        %532 = vmatprep.subr.bf16.mxu0 0
        %533 = vmatpush1.bf16.msra.mxu0 0
        %534 = vmatprep.subr.bf16.mxu0 0
        %535 = vmatpush1.bf16.msra.mxu0 0
        %536 = vmatprep.subr.bf16.mxu0 0
        %537 = vmatpush1.bf16.msra.mxu0 0
        %538 = vmatprep.subr.bf16.mxu0 0
        %539 = vmatpush1.bf16.msra.mxu0 0
        %540 = vmatprep.subr.bf16.mxu0 0
        %541 = vmatpush1.bf16.msra.mxu0 0
        %542 = vmatprep.subr.bf16.mxu0 0
        %543 = vmatpush1.bf16.msra.mxu0 0
        %544 = vmatprep.subr.bf16.mxu0 0
        %545 = vmatpush1.bf16.msra.mxu0 0
        %546 = vmatprep.subr.bf16.mxu0 0
        %547 = vmatpush1.bf16.msra.mxu0 0
        %548 = vmatprep.mubr.bf16.mxu0 0
        %549 = vmatmul.mubr.bf16.gmra.mrb[0].mxu0 %v511
        %v550 = vpop.f32.mrb[0].mxu0
        %v551 = vadd.f32 0.0, %v550
        %v552 = vpop.f32.mrb[0].mxu0
        %v553 = vpop.f32.mrb[0].mxu0
        %v554 = vpop.f32.mrb[0].mxu0
        %555 = vdwg.mxu0
        %v556 = vpack.c.bf16 %v551, %v551
        %v558 = vrot.slane %v282, 4
        %v560 = vsel %vm333, %v556, 0
        %v563 = vsel %vm399, %v558, 0
        %565 = vmatprep.subr.bf16.mxu0 0
        %566 = vmatpush1.bf16.msra.mxu0 %v563
        %567 = vmatprep.subr.bf16.mxu0 0
        %568 = vmatpush1.bf16.msra.mxu0 0
        %569 = vmatprep.subr.bf16.mxu0 0
        %570 = vmatpush1.bf16.msra.mxu0 0
        %571 = vmatprep.subr.bf16.mxu0 0
        %572 = vmatpush1.bf16.msra.mxu0 0
        %573 = vmatprep.subr.bf16.mxu0 0
        %574 = vmatpush1.bf16.msra.mxu0 0
        %575 = vmatprep.subr.bf16.mxu0 0
        %576 = vmatpush1.bf16.msra.mxu0 0
        %577 = vmatprep.subr.bf16.mxu0 0
        %578 = vmatpush1.bf16.msra.mxu0 0
        %579 = vmatprep.subr.bf16.mxu0 0
        %580 = vmatpush1.bf16.msra.mxu0 0
        %581 = vmatprep.subr.bf16.mxu0 0
        %582 = vmatpush1.bf16.msra.mxu0 0
        %583 = vmatprep.subr.bf16.mxu0 0
        %584 = vmatpush1.bf16.msra.mxu0 0
        %585 = vmatprep.subr.bf16.mxu0 0
        %586 = vmatpush1.bf16.msra.mxu0 0
        %587 = vmatprep.subr.bf16.mxu0 0
        %588 = vmatpush1.bf16.msra.mxu0 0
        %589 = vmatprep.subr.bf16.mxu0 0
        %590 = vmatpush1.bf16.msra.mxu0 0
        %591 = vmatprep.subr.bf16.mxu0 0
        %592 = vmatpush1.bf16.msra.mxu0 0
        %593 = vmatprep.subr.bf16.mxu0 0
        %594 = vmatpush1.bf16.msra.mxu0 0
        %595 = vmatprep.subr.bf16.mxu0 0
        %596 = vmatpush1.bf16.msra.mxu0 0
        %597 = vmatprep.mubr.bf16.mxu0 0
        %598 = vmatmul.mubr.bf16.gmra.mrb[0].mxu0 %v560
        %v599 = vpop.f32.mrb[0].mxu0
        %v600 = vadd.f32 0.0, %v599
        %v601 = vpop.f32.mrb[0].mxu0
        %v602 = vpop.f32.mrb[0].mxu0
        %v603 = vpop.f32.mrb[0].mxu0
        %604 = vdwg.mxu0
        %v606 = vsel %vm333, %v443, 0
        %v609 = vsel %vm399, %v282, 0
        %611 = vmatprep.subr.bf16.mxu0 0
        %612 = vmatpush1.bf16.msra.mxu0 %v609
        %613 = vmatprep.subr.bf16.mxu0 0
        %614 = vmatpush1.bf16.msra.mxu0 0
        %615 = vmatprep.subr.bf16.mxu0 0
        %616 = vmatpush1.bf16.msra.mxu0 0
        %617 = vmatprep.subr.bf16.mxu0 0
        %618 = vmatpush1.bf16.msra.mxu0 0
        %619 = vmatprep.subr.bf16.mxu0 0
        %620 = vmatpush1.bf16.msra.mxu0 0
        %621 = vmatprep.subr.bf16.mxu0 0
        %622 = vmatpush1.bf16.msra.mxu0 0
        %623 = vmatprep.subr.bf16.mxu0 0
        %624 = vmatpush1.bf16.msra.mxu0 0
        %625 = vmatprep.subr.bf16.mxu0 0
        %626 = vmatpush1.bf16.msra.mxu0 0
        %627 = vmatprep.subr.bf16.mxu0 0
        %628 = vmatpush1.bf16.msra.mxu0 0
        %629 = vmatprep.subr.bf16.mxu0 0
        %630 = vmatpush1.bf16.msra.mxu0 0
        %631 = vmatprep.subr.bf16.mxu0 0
        %632 = vmatpush1.bf16.msra.mxu0 0
        %633 = vmatprep.subr.bf16.mxu0 0
        %634 = vmatpush1.bf16.msra.mxu0 0
        %635 = vmatprep.subr.bf16.mxu0 0
        %636 = vmatpush1.bf16.msra.mxu0 0
        %637 = vmatprep.subr.bf16.mxu0 0
        %638 = vmatpush1.bf16.msra.mxu0 0
        %639 = vmatprep.subr.bf16.mxu0 0
        %640 = vmatpush1.bf16.msra.mxu0 0
        %641 = vmatprep.subr.bf16.mxu0 0
        %642 = vmatpush1.bf16.msra.mxu0 0
        %643 = vmatprep.mubr.bf16.mxu0 0
        %644 = vmatmul.mubr.bf16.gmra.mrb[0].mxu0 %v606
        %v645 = vpop.f32.mrb[0].mxu0
        %v646 = vadd.f32 %v600, %v645
        %v647 = vpop.f32.mrb[0].mxu0
        %v648 = vpop.f32.mrb[0].mxu0
        %v649 = vpop.f32.mrb[0].mxu0
        %650 = vdwg.mxu0
        %651 = vrot.lane.b32.xlu0 %v329, 112
        %v652 = vpop.permute.xlu0 %651
        %653 = vrot.lane.b32.xlu0 %v329, 80
        %v654 = vpop.permute.xlu0 %653
        %v656 = vsel %vm333, %v652, 0
        %v659 = vsel %vm333, %v654, 0
        %661 = vmatprep.subr.bf16.mxu0 0
        %662 = vmatpush1.bf16.xpose.msra.mxu0 %v659
        %663 = vmatprep.subr.bf16.mxu0 0
        %664 = vmatpush1.bf16.xpose.msra.mxu0 0
        %665 = vmatprep.subr.bf16.mxu0 0
        %666 = vmatpush1.bf16.xpose.msra.mxu0 0
        %667 = vmatprep.subr.bf16.mxu0 0
        %668 = vmatpush1.bf16.xpose.msra.mxu0 0
        %669 = vmatprep.subr.bf16.mxu0 0
        %670 = vmatpush1.bf16.xpose.msra.mxu0 0
        %671 = vmatprep.subr.bf16.mxu0 0
        %672 = vmatpush1.bf16.xpose.msra.mxu0 0
        %673 = vmatprep.subr.bf16.mxu0 0
        %674 = vmatpush1.bf16.xpose.msra.mxu0 0
        %675 = vmatprep.subr.bf16.mxu0 0
        %676 = vmatpush1.bf16.xpose.msra.mxu0 0
        %677 = vmatprep.subr.bf16.mxu0 0
        %678 = vmatpush1.bf16.xpose.msra.mxu0 0
        %679 = vmatprep.subr.bf16.mxu0 0
        %680 = vmatpush1.bf16.xpose.msra.mxu0 0
        %681 = vmatprep.subr.bf16.mxu0 0
        %682 = vmatpush1.bf16.xpose.msra.mxu0 0
        %683 = vmatprep.subr.bf16.mxu0 0
        %684 = vmatpush1.bf16.xpose.msra.mxu0 0
        %685 = vmatprep.subr.bf16.mxu0 0
        %686 = vmatpush1.bf16.xpose.msra.mxu0 0
        %687 = vmatprep.subr.bf16.mxu0 0
        %688 = vmatpush1.bf16.xpose.msra.mxu0 0
        %689 = vmatprep.subr.bf16.mxu0 0
        %690 = vmatpush1.bf16.xpose.msra.mxu0 0
        %691 = vmatprep.subr.bf16.mxu0 0
        %692 = vmatpush1.bf16.xpose.msra.mxu0 0
        %693 = vmatprep.mubr.bf16.mxu0 0
        %694 = vmatmul.mubr.bf16.gmra.mrb[0].mxu0 %v656
        %v695 = vpop.f32.mrb[0].mxu0
        %v696 = vadd.f32 0.0, %v695
        %v697 = vpop.f32.mrb[0].mxu0
        %v698 = vpop.f32.mrb[0].mxu0
        %v699 = vpop.f32.mrb[0].mxu0
        %700 = vdwg.mxu0
        %v701 = vmul.f32 %v696, 0.35355338
        %v702 = vadd.f32 %v701, %v284
        %v703 = vsel %vm333, %v702, -inf
        %704 = vmax.xlane.f32.xlu0 %v703
        %v705 = vpop.xlane.xlu0 %704
        %v706 = vsub.f32 %v702, %v705
        %v707 = vmul.f32 %v706, 1.442695
        %v708 = vpow.pop %v707
        %v709 = vsel %vm333, %v708, 0.0
        %710 = vadd.xlane.f32.xlu0 %v709
        %v711 = vpop.xlane.xlu0 %710
        %v712 = vrcp.pop %v711
        %v713 = vmul.f32 %v708, %v712
        %v714 = vpack.c.bf16 %v713, %v713
        %715 = vrot.lane.b32.xlu0 %v329, 48
        %v716 = vpop.permute.xlu0 %715
        %v718 = vsel %vm333, %v714, 0
        %v721 = vsel %vm399, %v716, 0
        %723 = vmatprep.subr.bf16.mxu0 0
        %724 = vmatpush1.bf16.msra.mxu0 %v721
        %725 = vmatprep.subr.bf16.mxu0 0
        %726 = vmatpush1.bf16.msra.mxu0 0
        %727 = vmatprep.subr.bf16.mxu0 0
        %728 = vmatpush1.bf16.msra.mxu0 0
        %729 = vmatprep.subr.bf16.mxu0 0
        %730 = vmatpush1.bf16.msra.mxu0 0
        %731 = vmatprep.subr.bf16.mxu0 0
        %732 = vmatpush1.bf16.msra.mxu0 0
        %733 = vmatprep.subr.bf16.mxu0 0
        %734 = vmatpush1.bf16.msra.mxu0 0
        %735 = vmatprep.subr.bf16.mxu0 0
        %736 = vmatpush1.bf16.msra.mxu0 0
        %737 = vmatprep.subr.bf16.mxu0 0
        %738 = vmatpush1.bf16.msra.mxu0 0
        %739 = vmatprep.subr.bf16.mxu0 0
        %740 = vmatpush1.bf16.msra.mxu0 0
        %741 = vmatprep.subr.bf16.mxu0 0
        %742 = vmatpush1.bf16.msra.mxu0 0
        %743 = vmatprep.subr.bf16.mxu0 0
        %744 = vmatpush1.bf16.msra.mxu0 0
        %745 = vmatprep.subr.bf16.mxu0 0
        %746 = vmatpush1.bf16.msra.mxu0 0
        %747 = vmatprep.subr.bf16.mxu0 0
        %748 = vmatpush1.bf16.msra.mxu0 0
        %749 = vmatprep.subr.bf16.mxu0 0
        %750 = vmatpush1.bf16.msra.mxu0 0
        %751 = vmatprep.subr.bf16.mxu0 0
        %752 = vmatpush1.bf16.msra.mxu0 0
        %753 = vmatprep.subr.bf16.mxu0 0
        %754 = vmatpush1.bf16.msra.mxu0 0
        %755 = vmatprep.mubr.bf16.mxu0 0
        %756 = vmatmul.mubr.bf16.gmra.mrb[0].mxu0 %v718
        %v757 = vpop.f32.mrb[0].mxu0
        %v758 = vadd.f32 0.0, %v757
        %v759 = vpop.f32.mrb[0].mxu0
        %v760 = vpop.f32.mrb[0].mxu0
        %v761 = vpop.f32.mrb[0].mxu0
        %762 = vdwg.mxu0
        %v763 = vpack.c.bf16 %v758, %v758
        %v765 = vsel %vm333, %v763, 0
        %v768 = vsel %vm399, %v283, 0
        %770 = vmatprep.subr.bf16.mxu0 0
        %771 = vmatpush1.bf16.msra.mxu0 %v768
        %772 = vmatprep.subr.bf16.mxu0 0
        %773 = vmatpush1.bf16.msra.mxu0 0
        %774 = vmatprep.subr.bf16.mxu0 0
        %775 = vmatpush1.bf16.msra.mxu0 0
        %776 = vmatprep.subr.bf16.mxu0 0
        %777 = vmatpush1.bf16.msra.mxu0 0
        %778 = vmatprep.subr.bf16.mxu0 0
        %779 = vmatpush1.bf16.msra.mxu0 0
        %780 = vmatprep.subr.bf16.mxu0 0
        %781 = vmatpush1.bf16.msra.mxu0 0
        %782 = vmatprep.subr.bf16.mxu0 0
        %783 = vmatpush1.bf16.msra.mxu0 0
        %784 = vmatprep.subr.bf16.mxu0 0
        %785 = vmatpush1.bf16.msra.mxu0 0
        %786 = vmatprep.subr.bf16.mxu0 0
        %787 = vmatpush1.bf16.msra.mxu0 0
        %788 = vmatprep.subr.bf16.mxu0 0
        %789 = vmatpush1.bf16.msra.mxu0 0
        %790 = vmatprep.subr.bf16.mxu0 0
        %791 = vmatpush1.bf16.msra.mxu0 0
        %792 = vmatprep.subr.bf16.mxu0 0
        %793 = vmatpush1.bf16.msra.mxu0 0
        %794 = vmatprep.subr.bf16.mxu0 0
        %795 = vmatpush1.bf16.msra.mxu0 0
        %796 = vmatprep.subr.bf16.mxu0 0
        %797 = vmatpush1.bf16.msra.mxu0 0
        %798 = vmatprep.subr.bf16.mxu0 0
        %799 = vmatpush1.bf16.msra.mxu0 0
        %800 = vmatprep.subr.bf16.mxu0 0
        %801 = vmatpush1.bf16.msra.mxu0 0
        %802 = vmatprep.mubr.bf16.mxu0 0
        %803 = vmatmul.mubr.bf16.gmra.mrb[0].mxu0 %v765
        %v804 = vpop.f32.mrb[0].mxu0
        %v805 = vadd.f32 0.0, %v804
        %v806 = vpop.f32.mrb[0].mxu0
        %v807 = vpop.f32.mrb[0].mxu0
        %v808 = vpop.f32.mrb[0].mxu0
        %809 = vdwg.mxu0
        %v810 = vadd.f32 %v646, %v805
        %811 = vrot.lane.b32.xlu0 %v329, 104
        %v812 = vpop.permute.xlu0 %811
        %813 = vrot.lane.b32.xlu0 %v329, 72
        %v814 = vpop.permute.xlu0 %813
        %v816 = vsel %vm333, %v812, 0
        %v819 = vsel %vm333, %v814, 0
        %821 = vmatprep.subr.bf16.mxu0 0
        %822 = vmatpush1.bf16.xpose.msra.mxu0 %v819
        %823 = vmatprep.subr.bf16.mxu0 0
        %824 = vmatpush1.bf16.xpose.msra.mxu0 0
        %825 = vmatprep.subr.bf16.mxu0 0
        %826 = vmatpush1.bf16.xpose.msra.mxu0 0
        %827 = vmatprep.subr.bf16.mxu0 0
        %828 = vmatpush1.bf16.xpose.msra.mxu0 0
        %829 = vmatprep.subr.bf16.mxu0 0
        %830 = vmatpush1.bf16.xpose.msra.mxu0 0
        %831 = vmatprep.subr.bf16.mxu0 0
        %832 = vmatpush1.bf16.xpose.msra.mxu0 0
        %833 = vmatprep.subr.bf16.mxu0 0
        %834 = vmatpush1.bf16.xpose.msra.mxu0 0
        %835 = vmatprep.subr.bf16.mxu0 0
        %836 = vmatpush1.bf16.xpose.msra.mxu0 0
        %837 = vmatprep.subr.bf16.mxu0 0
        %838 = vmatpush1.bf16.xpose.msra.mxu0 0
        %839 = vmatprep.subr.bf16.mxu0 0
        %840 = vmatpush1.bf16.xpose.msra.mxu0 0
        %841 = vmatprep.subr.bf16.mxu0 0
        %842 = vmatpush1.bf16.xpose.msra.mxu0 0
        %843 = vmatprep.subr.bf16.mxu0 0
        %844 = vmatpush1.bf16.xpose.msra.mxu0 0
        %845 = vmatprep.subr.bf16.mxu0 0
        %846 = vmatpush1.bf16.xpose.msra.mxu0 0
        %847 = vmatprep.subr.bf16.mxu0 0
        %848 = vmatpush1.bf16.xpose.msra.mxu0 0
        %849 = vmatprep.subr.bf16.mxu0 0
        %850 = vmatpush1.bf16.xpose.msra.mxu0 0
        %851 = vmatprep.subr.bf16.mxu0 0
        %852 = vmatpush1.bf16.xpose.msra.mxu0 0
        %853 = vmatprep.mubr.bf16.mxu0 0
        %854 = vmatmul.mubr.bf16.gmra.mrb[0].mxu0 %v816
        %v855 = vpop.f32.mrb[0].mxu0
        %v856 = vadd.f32 0.0, %v855
        %v857 = vpop.f32.mrb[0].mxu0
        %v858 = vpop.f32.mrb[0].mxu0
        %v859 = vpop.f32.mrb[0].mxu0
        %860 = vdwg.mxu0
        %v861 = vmul.f32 %v856, 0.35355338
        %v862 = vadd.f32 %v861, %v284
        %v863 = vsel %vm333, %v862, -inf
        %864 = vmax.xlane.f32.xlu0 %v863
        %v865 = vpop.xlane.xlu0 %864
        %v866 = vsub.f32 %v862, %v865
        %v867 = vmul.f32 %v866, 1.442695
        %v868 = vpow.pop %v867
        %v869 = vsel %vm333, %v868, 0.0
        %870 = vadd.xlane.f32.xlu0 %v869
        %v871 = vpop.xlane.xlu0 %870
        %v872 = vrcp.pop %v871
        %v873 = vmul.f32 %v868, %v872
        %v874 = vpack.c.bf16 %v873, %v873
        %875 = vrot.lane.b32.xlu0 %v329, 40
        %v876 = vpop.permute.xlu0 %875
        %v878 = vsel %vm333, %v874, 0
        %v881 = vsel %vm399, %v876, 0
        %883 = vmatprep.subr.bf16.mxu0 0
        %884 = vmatpush1.bf16.msra.mxu0 %v881
        %885 = vmatprep.subr.bf16.mxu0 0
        %886 = vmatpush1.bf16.msra.mxu0 0
        %887 = vmatprep.subr.bf16.mxu0 0
        %888 = vmatpush1.bf16.msra.mxu0 0
        %889 = vmatprep.subr.bf16.mxu0 0
        %890 = vmatpush1.bf16.msra.mxu0 0
        %891 = vmatprep.subr.bf16.mxu0 0
        %892 = vmatpush1.bf16.msra.mxu0 0
        %893 = vmatprep.subr.bf16.mxu0 0
        %894 = vmatpush1.bf16.msra.mxu0 0
        %895 = vmatprep.subr.bf16.mxu0 0
        %896 = vmatpush1.bf16.msra.mxu0 0
        %897 = vmatprep.subr.bf16.mxu0 0
        %898 = vmatpush1.bf16.msra.mxu0 0
        %899 = vmatprep.subr.bf16.mxu0 0
        %900 = vmatpush1.bf16.msra.mxu0 0
        %901 = vmatprep.subr.bf16.mxu0 0
        %902 = vmatpush1.bf16.msra.mxu0 0
        %903 = vmatprep.subr.bf16.mxu0 0
        %904 = vmatpush1.bf16.msra.mxu0 0
        %905 = vmatprep.subr.bf16.mxu0 0
        %906 = vmatpush1.bf16.msra.mxu0 0
        %907 = vmatprep.subr.bf16.mxu0 0
        %908 = vmatpush1.bf16.msra.mxu0 0
        %909 = vmatprep.subr.bf16.mxu0 0
        %910 = vmatpush1.bf16.msra.mxu0 0
        %911 = vmatprep.subr.bf16.mxu0 0
        %912 = vmatpush1.bf16.msra.mxu0 0
        %913 = vmatprep.subr.bf16.mxu0 0
        %914 = vmatpush1.bf16.msra.mxu0 0
        %915 = vmatprep.mubr.bf16.mxu0 0
        %916 = vmatmul.mubr.bf16.gmra.mrb[0].mxu0 %v878
        %v917 = vpop.f32.mrb[0].mxu0
        %v918 = vadd.f32 0.0, %v917
        %v919 = vpop.f32.mrb[0].mxu0
        %v920 = vpop.f32.mrb[0].mxu0
        %v921 = vpop.f32.mrb[0].mxu0
        %922 = vdwg.mxu0
        %v923 = vpack.c.bf16 %v918, %v918
        %v925 = vrot.slane %v283, 4
        %v927 = vsel %vm333, %v923, 0
        %v930 = vsel %vm399, %v925, 0
        %932 = vmatprep.subr.bf16.mxu0 0
        %933 = vmatpush1.bf16.msra.mxu0 %v930
        %934 = vmatprep.subr.bf16.mxu0 0
        %935 = vmatpush1.bf16.msra.mxu0 0
        %936 = vmatprep.subr.bf16.mxu0 0
        %937 = vmatpush1.bf16.msra.mxu0 0
        %938 = vmatprep.subr.bf16.mxu0 0
        %939 = vmatpush1.bf16.msra.mxu0 0
        %940 = vmatprep.subr.bf16.mxu0 0
        %941 = vmatpush1.bf16.msra.mxu0 0
        %942 = vmatprep.subr.bf16.mxu0 0
        %943 = vmatpush1.bf16.msra.mxu0 0
        %944 = vmatprep.subr.bf16.mxu0 0
        %945 = vmatpush1.bf16.msra.mxu0 0
        %946 = vmatprep.subr.bf16.mxu0 0
        %947 = vmatpush1.bf16.msra.mxu0 0
        %948 = vmatprep.subr.bf16.mxu0 0
        %949 = vmatpush1.bf16.msra.mxu0 0
        %950 = vmatprep.subr.bf16.mxu0 0
        %951 = vmatpush1.bf16.msra.mxu0 0
        %952 = vmatprep.subr.bf16.mxu0 0
        %953 = vmatpush1.bf16.msra.mxu0 0
        %954 = vmatprep.subr.bf16.mxu0 0
        %955 = vmatpush1.bf16.msra.mxu0 0
        %956 = vmatprep.subr.bf16.mxu0 0
        %957 = vmatpush1.bf16.msra.mxu0 0
        %958 = vmatprep.subr.bf16.mxu0 0
        %959 = vmatpush1.bf16.msra.mxu0 0
        %960 = vmatprep.subr.bf16.mxu0 0
        %961 = vmatpush1.bf16.msra.mxu0 0
        %962 = vmatprep.subr.bf16.mxu0 0
        %963 = vmatpush1.bf16.msra.mxu0 0
        %964 = vmatprep.mubr.bf16.mxu0 0
        %965 = vmatmul.mubr.bf16.gmra.mrb[0].mxu0 %v927
        %v966 = vpop.f32.mrb[0].mxu0
        %v967 = vadd.f32 0.0, %v966
        %v968 = vpop.f32.mrb[0].mxu0
        %v969 = vpop.f32.mrb[0].mxu0
        %v970 = vpop.f32.mrb[0].mxu0
        %971 = vdwg.mxu0
        %v972 = vadd.f32 %v810, %v967
        %v973 = vld [vmem:[%s4] sm:$0x1]
        %v975 = vlaneseq
        %v976 = vshrl.u32 %v975, 7
        %v977 = vsub.s32 0, %v976
        %v978 = vrot.slane %v973, %v977
        %v980 = vadd.f32 %v972, %v978
        %981 = vst.msk [vmem:[%s268] sm:$0xff] %vm285, %v980
        %s982 = sand.u32 %s141, 1
        %s983 = scalar_lea.sflag [#allocation4], %s982
        %s984 = sand.u32 %s141, 1
        %s985 = smul.addr %s984, 8
        %s986 = scalar_lea.vmem [#allocation8], %s985
        // Predicated region
        $region53: #{multi_head_attention.1} parent=39 // pred_check
          %p987 = pneg %p151
        $region54: #{multi_head_attention.1} parent=39 // pred_check_branch
          %989 = sbr.rel (%p987) target = $region56
        $region55: #{multi_head_attention.1} parent=39 // pred_region
          %s991 = ssub.s32 128, 128
          %992 = vsyncadd %s983, %s991
          %s993 = smul.addr %s23, 128
          %s994 = scalar_lea.hbm %s5, %s993
          %s996 = sshll.u32 %s986, 4
          %s997 = int_to_ptr.vmem [resolvable:$true] %s996
          %999 = dma.vmem_to_hbm [thread:$0]  %s997, 128, %s994, %s983
        $region56: #{multi_head_attention.1} parent=39 // pred_fallthru
          _
      $region40: #{multi_head_attention.1} parent=5 // pred_fallthru
        _
      %p1000 = scmp.le.s32.totalorder 2, %s18
      // Predicated region
      $region57: #{multi_head_attention.1} parent=5 // pred_check
        %p1001 = pneg %p1000
      $region58: #{multi_head_attention.1} parent=5 // pred_check_branch
        %1003 = sbr.rel (%p1001) target = $region60
      $region59: #{multi_head_attention.1} parent=5 // pred_region
        %s1004 = ssub.s32 %s18, 2
        // Predicated region
        $region61: #{multi_head_attention.1} parent=59 // pred_check
          %p1005 = pneg %p157
        $region62: #{multi_head_attention.1} parent=59 // pred_check_branch
          %1007 = sbr.rel (%p1005) target = $region64
        $region63: #{multi_head_attention.1} parent=59 // pred_region
          %s1008 = sand.u32 %s142, 1
          %s1009 = scalar_lea.sflag [#allocation4], %s1008
          %s1010 = sand.u32 %s142, 1
          %s1011 = smul.addr %s1010, 8
          %s1012 = scalar_lea.vmem [#allocation8], %s1011
          %1013 = dma.done %s1009, 128
        $region64: #{multi_head_attention.1} parent=59 // pred_fallthru
          _
      $region60: #{multi_head_attention.1} parent=5 // pred_fallthru
        _
    $region6: #{multi_head_attention.1} parent=1 // loop_footer
      %s22 = sadd.s32 1, %s18
    $region7: #{multi_head_attention.1} parent=1 // loop_footer_branch
      %17 = sbr.rel target = $region3
    $region8: #{multi_head_attention.1} parent=1 // loop_exit
      _
    %1014 = vsyncpa [#allocation3], 1
    %s1015 = scalar_lea.sflag [#allocation3], 1
    %1016 = vsyncpa %s1015, 1
    %1017 = vsyncpa [#allocation6], 1
    %1018 = vsyncpa [#allocation4], 1
    %s1019 = scalar_lea.sflag [#allocation4], 1
    %1020 = vsyncpa %s1019, 1

</llo_original>
